<compile_context>
chip_gen: v6e
topology: v6e:2x2x1
jax: 0.10.0
libtpu: 0.0.40
codegen_flags: <defaults>
</compile_context>

<pallas_src>
import functools

import jax
import jax.numpy as jnp
from jax.experimental import pallas as pl
from jax.experimental.pallas import tpu as pltpu

_MIB = 1024 * 1024


def _round_up(x, m):
    return ((x + m - 1) // m) * m


def _supcon_kernel(*refs, n_total, n_pad_cols, inv_temp, scale, use_labels,
                   lhs_dtype, contrast_resident):
    if use_labels:
        (den_ref, lab_a_ref, lab_c_ref, a_ref, c_ref,
         out_ref, m_sc, l_sc, num_sc, lhs_sc) = refs
    else:
        (den_ref, mask_ref, a_ref, c_ref,
         out_ref, m_sc, l_sc, num_sc, lhs_sc) = refs

    i = pl.program_id(0)            # anchor tile     ("parallel")
    k = pl.program_id(1)            # contrast tile   ("arbitrary", innermost)
    nk = pl.num_programs(1)

    @pl.when(k == 0)
    def _init():
        m_sc[...] = jnp.full_like(m_sc, -jnp.inf)
        l_sc[...] = jnp.zeros_like(l_sc)
        num_sc[...] = jnp.zeros_like(num_sc)
        # Hoisted LHS: 1/temperature scale (+ optional bf16 cast) done once per
        # anchor tile instead of once per contrast tile.
        lhs_sc[...] = (a_ref[...] * inv_temp).astype(lhs_dtype)

    # RHS tile: k-th slab of the VMEM-resident contrast matrix, or the streamed
    # [D, n_tile] tile.  Lane-dense N, MXU-ready.
    rhs = c_ref[k] if contrast_resident else c_ref[...]
    a_tile = lhs_sc.shape[0]
    n_tile = rhs.shape[1]

    raw = jax.lax.dot_general(
        lhs_sc[...], rhs, dimension_numbers=(((1,), (0,)), ((), ())),
        preferred_element_type=jnp.float32)            # [a_tile, n_tile]

    # Online-softmax running max over *unmasked* logits (torch semantics).
    # Zero-padded contrast columns give raw == 0, never above the true row max
    # (the self-logit ||a||^2 / T >= 0 is always present in the row).
    m_prev = m_sc[...]
    m_new = jnp.maximum(m_prev, jnp.max(raw, axis=1, keepdims=True))
    alpha = jnp.exp(m_prev - m_new)
    p = jnp.exp(raw - m_new)

    if n_pad_cols:
        # Padded columns only exist in the last contrast tile; the compare is
        # all-True elsewhere, so applying it unconditionally is cheap and safe.
        col_valid = (k * n_tile +
                     jax.lax.broadcasted_iota(jnp.int32, (a_tile, n_tile), 1)
                     ) < n_total
    else:
        col_valid = None

    def _acc(p_l, num_term):
        l_sc[...] = alpha * l_sc[...] + jnp.sum(p_l, axis=1, keepdims=True)
        num_sc[...] = num_sc[...] + jnp.sum(num_term, axis=1, keepdims=True)

    def _not_diag():
        row_g = i * a_tile + jax.lax.broadcasted_iota(
            jnp.int32, (a_tile, n_tile), 0)
        col_g = k * n_tile + jax.lax.broadcasted_iota(
            jnp.int32, (a_tile, n_tile), 1)
        return row_g != col_g          # torch logits_mask (boolean), this tile

    def _mask_cols(p_l):
        return p_l if col_valid is None else jnp.where(col_valid, p_l, 0.0)

    # Only tiles intersecting the diagonal pay for the self-contrast mask.
    diag_here = jnp.logical_and(i * a_tile < (k + 1) * n_tile,
                                k * n_tile < (i + 1) * a_tile)

    if use_labels:
        eq = lab_a_ref[...] == lab_c_ref[...]      # bool positives, no f32 mask

        @pl.when(diag_here)
        def _():
            nd = _not_diag()
            _acc(_mask_cols(jnp.where(nd, p, 0.0)),
                 jnp.where(jnp.logical_and(eq, nd), raw, 0.0))

        @pl.when(jnp.logical_not(diag_here))
        def _():
            _acc(_mask_cols(p), jnp.where(eq, raw, 0.0))
    else:
        m_t = mask_ref[...]

        @pl.when(diag_here)
        def _():
            nd = _not_diag()
            _acc(_mask_cols(jnp.where(nd, p, 0.0)),
                 jnp.where(nd, m_t, 0.0) * raw)

        @pl.when(jnp.logical_not(diag_here))
        def _():
            _acc(_mask_cols(p), m_t * raw)

    m_sc[...] = m_new

    @pl.when(k == nk - 1)
    def _finalize():
        # Padded columns were masked out of l_sc, so no analytic correction.
        # NOTE: den == 0 (anchor with no positives) gives NaN, matching torch.
        mean_log_prob_pos = (num_sc[...] / den_ref[...]
                             - m_sc[...] - jnp.log(l_sc[...]))
        out_ref[...] = (-scale) * mean_log_prob_pos


def supcon_loss(features, labels=None, mask=None, *, temperature=0.07,
                contrast_mode='all', base_temperature=0.07,
                use_bf16_matmul=False):
    """JAX/Pallas equivalent of SupConLoss.forward (forward value only)."""
    features = jnp.asarray(features)
    if features.ndim < 3:
        raise ValueError('`features` needs to be [bsz, n_views, ...], '
                         'at least 3 dimensions are required')
    bsz, n_views = features.shape[0], features.shape[1]
    feats = features.reshape(bsz, n_views, -1).astype(jnp.float32)
    D = feats.shape[-1]

    if labels is not None and mask is not None:
        raise ValueError('Cannot define both `labels` and `mask`')

    # contrast_feature = cat(unbind(features, 1), 0): view-major [N, D].
    contrast_feature = feats.transpose(1, 0, 2).reshape(bsz * n_views, D)
    N = bsz * n_views
    if contrast_mode == 'one':
        anchor_feature, anchor_count = feats[:, 0], 1
    elif contrast_mode == 'all':
        anchor_feature, anchor_count = contrast_feature, n_views
    else:
        raise ValueError('Unknown mode: {}'.format(contrast_mode))
    A = bsz * anchor_count

    # ---------------- hardware-aware tiling ----------------
    try:
        vmem_cap = int(pltpu.get_tpu_info().vmem_capacity_bytes)
    except Exception:                   # API unavailable: conservative fallback
        vmem_cap = 64 * _MIB            # v7x-safe
    vmem_budget = int(0.6 * vmem_cap)

    # 128 MiB parts (v5e/v6e) afford larger anchor tiles -> fewer contrast passes.
    A_TILE_MAX = 512 if vmem_cap >= 100 * _MIB else 256
    N_TILE_MAX = 512
    LANE = 128

    in_dtype = jnp.bfloat16 if use_bf16_matmul else jnp.float32
    in_bytes = 2 if use_bf16_matmul else 4
    a_align = 16 if use_bf16_matmul else 8          # bf16 sublane packing

    # N is always padded to a lane multiple; n_tile divides the padded N, so
    # every block is 128-lane aligned and there is no tile-level over-padding.
    N_pad = _round_up(N, LANE)
    if N_pad <= N_TILE_MAX:
        n_tile = N_pad
    else:
        n_tile = next(c for c in (512, 256, 128) if N_pad % c == 0)
    D_pad = _round_up(D, LANE)

    if A <= A_TILE_MAX:
        a_tile = _round_up(A, a_align)
    else:
        n_a_tiles = -(-A // A_TILE_MAX)
        a_tile = _round_up(-(-A // n_a_tiles), a_align)   # even, minimal padding

    def _vmem_est(at, nt, resident):
        est = 2 * at * D_pad * in_bytes                  # anchor tile (dbl buf)
        est += at * D_pad * in_bytes                     # hoisted LHS scratch
        if resident:
            est += 2 * D_pad * N_pad * in_bytes          # whole contrast matrix
        else:
            est += 2 * D_pad * nt * in_bytes             # streamed contrast tile
        est += 2 * (3 * at + nt) * 4                     # den / labels / out blocks
        if mask is not None:
            est += 2 * at * nt * 4                       # explicit tiled mask blocks
        est += 3 * at * 4                                # m / l / num scratch
        est += 8 * at * nt * 4                           # raw / p / select temporaries
        return est

    # D-aware shrink: keep the working set inside the per-core VMEM budget.
    # TODO(synk): for very large D (>~8K) a third innermost D grid axis with a
    # partial-logits accumulator would be needed; not implemented here.
    while (2 * D_pad * n_tile * in_bytes > vmem_budget // 3) and n_tile > LANE:
        half = n_tile // 2
        n_tile = half if (half % LANE == 0 and N_pad % half == 0) else LANE
    while _vmem_est(a_tile, n_tile, False) > vmem_budget and a_tile > 4 * a_align:
        a_tile = _round_up(a_tile // 2, a_align)
    if _vmem_est(a_tile, n_tile, False) > vmem_budget and n_tile > LANE:
        n_tile = LANE

    A_pad = _round_up(A, a_tile)
    n_pad_cols = N_pad - N
    grid = (A_pad // a_tile, N_pad // n_tile)
    nk = grid[1]

    # Keep the whole [D, N] contrast matrix VMEM-resident when it fits, so it
    # is streamed from HBM once instead of once per anchor tile.
    contrast_resident = (nk > 1
                         and _vmem_est(a_tile, n_tile, True) <= vmem_budget)
    est_final = _vmem_est(a_tile, n_tile, contrast_resident)

    # ---------------- HBM operands ----------------
    anchor_p = jnp.pad(anchor_feature,
                       ((0, A_pad - A), (0, D_pad - D))).astype(in_dtype)
    contrast_p = jnp.pad(contrast_feature, ((0, N_pad - N), (0, D_pad - D)))
    # [D_pad, N_pad]: lane-dense N for the MXU RHS; bf16 in HBM when requested.
    contrast_dn = contrast_p.T.astype(in_dtype)
    if contrast_resident:
        contrast_in = contrast_dn.reshape(D_pad, nk, n_tile).transpose(1, 0, 2)
        contrast_spec = pl.BlockSpec((nk, D_pad, n_tile), lambda i, k: (0, 0, 0))
    else:
        contrast_in = contrast_dn
        contrast_spec = pl.BlockSpec((D_pad, n_tile), lambda i, k: (0, k))

    anchor_spec = pl.BlockSpec((a_tile, D_pad), lambda i, k: (i, 0))
    out_spec = pl.BlockSpec((a_tile, 1), lambda i, k: (i, 0))
    col_spec = pl.BlockSpec((a_tile, 1), lambda i, k: (i, 0))    # den / lab_a

    use_labels = mask is None
    if use_labels:
        if labels is None:
            lab_small = jnp.arange(bsz, dtype=jnp.int32)         # SimCLR eye mask
        else:
            labels = jnp.asarray(labels).reshape(-1)
            if labels.shape[0] != bsz:
                raise ValueError('Num of labels does not match num of features')
            lab_small = labels.astype(jnp.int32)
        # Positive count per anchor (mask.sum(1) after removing self-contrast),
        # precomputed here so the kernel drops one cross-lane sum per tile.
        cnt = jnp.sum((lab_small[:, None] == lab_small[None, :])
                      .astype(jnp.float32), axis=1)
        den_full = jnp.tile(cnt * n_views - 1.0, anchor_count)    # [A]
        lab_c_full = jnp.tile(lab_small, n_views)                 # [N], view-major
        lab_a_full = lab_c_full[:A]
        # Padded rows/cols get a label that matches no real sample.
        pad_lab = lab_small.min() - jnp.int32(1)
        if A_pad > A:
            lab_a_full = jnp.concatenate(
                [lab_a_full, jnp.full((A_pad - A,), pad_lab, jnp.int32)])
        if N_pad > N:
            lab_c_full = jnp.concatenate(
                [lab_c_full, jnp.full((N_pad - N,), pad_lab, jnp.int32)])
        den_full = jnp.pad(den_full, (0, A_pad - A), constant_values=1.0)
        inputs = (den_full.reshape(A_pad, 1),
                  lab_a_full.reshape(A_pad, 1), lab_c_full.reshape(1, N_pad),
                  anchor_p, contrast_in)
        in_specs = [col_spec, col_spec,
                    pl.BlockSpec((1, n_tile), lambda i, k: (0, k)),
                    anchor_spec, contrast_spec]
        mask_bytes = 0
    else:
        # Explicit-mask fallback: ships the tiled mask (bandwidth-heavy, rare).
        mask_small = jnp.asarray(mask, jnp.float32)
        mask_tiled = jnp.tile(mask_small, (anchor_count, n_views))   # [A, N]
        idx = jnp.arange(A)
        den_full = mask_tiled.sum(axis=1) - mask_tiled[idx, idx]
        den_full = jnp.pad(den_full, (0, A_pad - A), constant_values=1.0)
        mask_full = jnp.pad(mask_tiled, ((0, A_pad - A), (0, N_pad - N)))
        inputs = (den_full.reshape(A_pad, 1), mask_full, anchor_p, contrast_in)
        in_specs = [col_spec,
                    pl.BlockSpec((a_tile, n_tile), lambda i, k: (i, k)),
                    anchor_spec, contrast_spec]
        mask_bytes = 4 * A_pad * N_pad

    kernel = functools.partial(
        _supcon_kernel,
        n_total=N, n_pad_cols=n_pad_cols,
        inv_temp=1.0 / temperature,
        scale=temperature / base_temperature,
        use_labels=use_labels, lhs_dtype=in_dtype,
        contrast_resident=contrast_resident)

    vmem_limit = int(min(max(2 * est_final, 16 * _MIB), int(0.85 * vmem_cap)))

    cost = pl.CostEstimate(
        flops=2 * A_pad * N_pad * D_pad,
        transcendentals=A_pad * N_pad,
        bytes_accessed=(in_bytes * A_pad * D_pad
                        + in_bytes * D_pad * N_pad
                        * (1 if contrast_resident else grid[0])
                        + mask_bytes + 16 * A_pad))

    out = pl.pallas_call(
        kernel,
        out_shape=jax.ShapeDtypeStruct((A_pad, 1), jnp.float32),
        grid=grid,
        in_specs=in_specs,
        out_specs=out_spec,
        scratch_shapes=[pltpu.VMEM((a_tile, 1), jnp.float32)] * 3
                      + [pltpu.VMEM((a_tile, D_pad), in_dtype)],
        compiler_params=pltpu.CompilerParams(
            # TODO(synk): on v7x use pltpu.CORE_PARALLEL on axis 0 so anchor
            # tiles shard across both TensorCores.
            dimension_semantics=("parallel", "arbitrary"),
            vmem_limit_bytes=vmem_limit,
        ),
        cost_estimate=cost,
    )(*inputs)

    # loss.view(anchor_count, batch_size).mean() == mean over all A anchor rows.
    return jnp.mean(out[:A, 0])


def _supcon_ref(features, labels=None, mask=None, temperature=0.07,
                contrast_mode='all', base_temperature=0.07):
    """Pure-JAX reference (direct port of the torch code)."""
    bsz, n_views = features.shape[0], features.shape[1]
    feats = features.reshape(bsz, n_views, -1).astype(jnp.float32)
    if labels is None and mask is None:
        mask = jnp.eye(bsz, dtype=jnp.float32)
    elif labels is not None:
        labels = jnp.asarray(labels).reshape(-1, 1)
        mask = (labels == labels.T).astype(jnp.float32)
    else:
        mask = jnp.asarray(mask, jnp.float32)
    contrast = feats.transpose(1, 0, 2).reshape(bsz * n_views, -1)
    if contrast_mode == 'one':
        anchor, anchor_count = feats[:, 0], 1
    else:
        anchor, anchor_count = contrast, n_views
    logits = jnp.matmul(anchor, contrast.T,
                        precision=jax.lax.Precision.HIGHEST) / temperature
    logits = logits - jnp.max(logits, axis=1, keepdims=True)
    mask = jnp.tile(mask, (anchor_count, n_views))
    A, N = mask.shape
    logits_mask = 1.0 - jnp.eye(A, N, dtype=jnp.float32)
    mask = mask * logits_mask
    exp_logits = jnp.exp(logits) * logits_mask
    log_prob = logits - jnp.log(exp_logits.sum(1, keepdims=True))
    mlpp = (mask * log_prob).sum(1) / mask.sum(1)
    loss = -(temperature / base_temperature) * mlpp
    return jnp.mean(loss)


if __name__ == "__main__":
    key = jax.random.PRNGKey(0)
    k1, k2, k3, k4 = jax.random.split(key, 4)

    def _norm(x):
        return x / jnp.linalg.norm(x, axis=-1, keepdims=True)

    # Small case (single tile): supervised, SimCLR, explicit-mask and 'one' mode.
    bsz, n_views, feat_dim = 8, 2, 32
    feats = _norm(jax.random.normal(k1, (bsz, n_views, feat_dim), jnp.float32))
    labels = jax.random.randint(k2, (bsz,), 0, 3)
    eye = jnp.eye(bsz, dtype=jnp.float32)

    checks = [
        (supcon_loss(feats, labels=labels), _supcon_ref(feats, labels=labels)),
        (supcon_loss(feats), _supcon_ref(feats)),
        (supcon_loss(feats, mask=eye), _supcon_ref(feats, mask=eye)),
        (supcon_loss(feats, labels=labels, contrast_mode='one'),
         _supcon_ref(feats, labels=labels, contrast_mode='one')),
    ]

    # Larger case: multiple anchor/contrast tiles, VMEM-resident contrast path.
    featsL = _norm(jax.random.normal(k3, (384, 2, 48), jnp.float32))
    labelsL = jax.random.randint(k3, (384,), 0, 10)
    checks.append((supcon_loss(featsL, labels=labelsL),
                   _supcon_ref(featsL, labels=labelsL)))

    # Ragged case: exercises anchor-row and contrast-column padding masks.
    featsP = _norm(jax.random.normal(k4, (300, 2, 40), jnp.float32))
    labelsP = jax.random.randint(k4, (300,), 0, 10)
    checks.append((supcon_loss(featsP, labels=labelsP),
                   _supcon_ref(featsP, labels=labelsP)))

    got = jax.block_until_ready([g for g, _ in checks])
    want = [w for _, w in checks]
    for g, w in zip(got, want):
        assert jnp.isfinite(g), (g, w)
        assert jnp.allclose(g, w, rtol=2e-2, atol=2e-2), (g, w)
    print("KERNEL_OK")
</pallas_src>

<mosaic_0001>
module attributes {stable_mosaic.version = 11 : i64} {
  func.func @_supcon_kernel(%arg0: i32, %arg1: i32, %arg2: memref<16x1xf32, #tpu.memory_space<vmem>>, %arg3: memref<16x1xi32, #tpu.memory_space<vmem>>, %arg4: memref<1x128xi32, #tpu.memory_space<vmem>>, %arg5: memref<16x128xf32, #tpu.memory_space<vmem>>, %arg6: memref<128x128xf32, #tpu.memory_space<vmem>>, %arg7: memref<16x1xf32, #tpu.memory_space<vmem>>, %arg8: memref<16x1xf32, #tpu.memory_space<vmem>>, %arg9: memref<16x1xf32, #tpu.memory_space<vmem>>, %arg10: memref<16x1xf32, #tpu.memory_space<vmem>>, %arg11: memref<16x128xf32, #tpu.memory_space<vmem>>) attributes {dimension_semantics = [#tpu.dimension_semantics<parallel>, #tpu.dimension_semantics<arbitrary>], iteration_bounds = array<i64: 1, 1>, scalar_prefetch = 0 : i64, scratch_operands = 4 : i64, tpu.core_type = #tpu.core_type<tc>, window_params = [{transform_indices = @transform_0, window_bounds = array<i64: 16, 1>}, {transform_indices = @transform_1, window_bounds = array<i64: 16, 1>}, {transform_indices = @transform_2, window_bounds = array<i64: 1, 128>}, {transform_indices = @transform_3, window_bounds = array<i64: 16, 128>}, {transform_indices = @transform_4, window_bounds = array<i64: 128, 128>}, {transform_indices = @transform_5, window_bounds = array<i64: 16, 1>}]} {
    %c0_i32 = arith.constant 0 : i32
    %0 = arith.cmpi eq, %arg1, %c0_i32 : i32
    %1 = arith.extui %0 : i1 to i32
    %c0_i32_0 = arith.constant 0 : i32
    %2 = arith.cmpi ne, %1, %c0_i32_0 : i32
    scf.if %2 {
      %cst_22 = arith.constant 0xFF800000 : f32
      %44 = vector.broadcast %cst_22 : f32 to vector<16x1xf32>
      %c0_23 = arith.constant 0 : index
      %c0_24 = arith.constant 0 : index
      %45 = vector.load %arg8[%c0_23, %c0_24] : memref<16x1xf32, #tpu.memory_space<vmem>>, vector<16x1xf32>
      tpu.vector_store %arg8[%c0_23, %c0_24], %44 {strides = array<i32>} : memref<16x1xf32, #tpu.memory_space<vmem>>, vector<16x1xf32>,
      %cst_25 = arith.constant 0.000000e+00 : f32
      %46 = vector.broadcast %cst_25 : f32 to vector<16x1xf32>
      %c0_26 = arith.constant 0 : index
      %c0_27 = arith.constant 0 : index
      %47 = vector.load %arg9[%c0_26, %c0_27] : memref<16x1xf32, #tpu.memory_space<vmem>>, vector<16x1xf32>
      tpu.vector_store %arg9[%c0_26, %c0_27], %46 {strides = array<i32>} : memref<16x1xf32, #tpu.memory_space<vmem>>, vector<16x1xf32>,
      %cst_28 = arith.constant 0.000000e+00 : f32
      %48 = vector.broadcast %cst_28 : f32 to vector<16x1xf32>
      %c0_29 = arith.constant 0 : index
      %c0_30 = arith.constant 0 : index
      %49 = vector.load %arg10[%c0_29, %c0_30] : memref<16x1xf32, #tpu.memory_space<vmem>>, vector<16x1xf32>
      tpu.vector_store %arg10[%c0_29, %c0_30], %48 {strides = array<i32>} : memref<16x1xf32, #tpu.memory_space<vmem>>, vector<16x1xf32>,
      %c0_31 = arith.constant 0 : index
      %c0_32 = arith.constant 0 : index
      %50 = vector.load %arg5[%c0_31, %c0_32] : memref<16x128xf32, #tpu.memory_space<vmem>>, vector<16x128xf32>
      %cst_33 = arith.constant 14.2857141 : f32
      %51 = vector.broadcast %cst_33 : f32 to vector<16x128xf32>
      %52 = arith.mulf %50, %51 : vector<16x128xf32>
      %c0_34 = arith.constant 0 : index
      %c0_35 = arith.constant 0 : index
      %53 = vector.load %arg11[%c0_34, %c0_35] : memref<16x128xf32, #tpu.memory_space<vmem>>, vector<16x128xf32>
      tpu.vector_store %arg11[%c0_34, %c0_35], %52 {strides = array<i32>} : memref<16x128xf32, #tpu.memory_space<vmem>>, vector<16x128xf32>,
    } else {
    }
    %c0 = arith.constant 0 : index
    %c0_1 = arith.constant 0 : index
    %3 = vector.load %arg6[%c0, %c0_1] : memref<128x128xf32, #tpu.memory_space<vmem>>, vector<128x128xf32>
    %c0_2 = arith.constant 0 : index
    %c0_3 = arith.constant 0 : index
    %4 = vector.load %arg11[%c0_2, %c0_3] : memref<16x128xf32, #tpu.memory_space<vmem>>, vector<16x128xf32>
    %cst = arith.constant dense<0.000000e+00> : vector<16x128xf32>
    %5 = tpu.matmul %4, %3, %cst {dimension_numbers = #tpu.dot_dimension_numbers<[1], [0], [0], [1], [0, 0, 1, 1], [], []>} : vector<16x128xf32>, vector<128x128xf32>, vector<16x128xf32> -> vector<16x128xf32>
    %c0_4 = arith.constant 0 : index
    %c0_5 = arith.constant 0 : index
    %6 = vector.load %arg8[%c0_4, %c0_5] : memref<16x1xf32, #tpu.memory_space<vmem>>, vector<16x1xf32>
    %cst_6 = arith.constant dense<0xFF800000> : vector<16xf32>
    %7 = vector.multi_reduction <maximumf>, %5, %cst_6 [1] : vector<16x128xf32> to vector<16xf32>
    %8 = vector.shape_cast %7 : vector<16xf32> to vector<16x1xf32>
    %9 = arith.maximumf %6, %8 : vector<16x1xf32>
    %10 = arith.subf %6, %9 : vector<16x1xf32>
    %11 = math.exp %10 : vector<16x1xf32>
    %12 = vector.broadcast %9 : vector<16x1xf32> to vector<16x128xf32>
    %13 = arith.subf %5, %12 : vector<16x128xf32>
    %14 = math.exp %13 : vector<16x128xf32>
    %c128_i32 = arith.constant 128 : i32
    %15 = arith.muli %arg1, %c128_i32 : i32
    %16 = tpu.iota {dimensions = array<i32: 1>} : vector<16x128xi32>
    %17 = vector.broadcast %15 : i32 to vector<16x128xi32>
    %18 = arith.addi %17, %16 : vector<16x128xi32>
    %c16_i32 = arith.constant 16 : i32
    %19 = vector.broadcast %c16_i32 : i32 to vector<16x128xi32>
    %20 = arith.cmpi slt, %18, %19 : vector<16x128xi32>
    %c16_i32_7 = arith.constant 16 : i32
    %21 = arith.muli %arg0, %c16_i32_7 : i32
    %c1_i32 = arith.constant 1 : i32
    %22 = arith.addi %arg1, %c1_i32 : i32
    %c128_i32_8 = arith.constant 128 : i32
    %23 = arith.muli %22, %c128_i32_8 : i32
    %24 = arith.cmpi slt, %21, %23 : i32
    %c128_i32_9 = arith.constant 128 : i32
    %25 = arith.muli %arg1, %c128_i32_9 : i32
    %c1_i32_10 = arith.constant 1 : i32
    %26 = arith.addi %arg0, %c1_i32_10 : i32
    %c16_i32_11 = arith.constant 16 : i32
    %27 = arith.muli %26, %c16_i32_11 : i32
    %28 = arith.cmpi slt, %25, %27 : i32
    %29 = arith.andi %24, %28 : i1
    %c0_12 = arith.constant 0 : index
    %c0_13 = arith.constant 0 : index
    %30 = vector.load %arg3[%c0_12, %c0_13] : memref<16x1xi32, #tpu.memory_space<vmem>>, vector<16x1xi32>
    %c0_14 = arith.constant 0 : index
    %c0_15 = arith.constant 0 : index
    %31 = vector.load %arg4[%c0_14, %c0_15] : memref<1x128xi32, #tpu.memory_space<vmem>>, vector<1x128xi32>
    %32 = vector.broadcast %30 : vector<16x1xi32> to vector<16x128xi32>
    %33 = vector.broadcast %31 : vector<1x128xi32> to vector<16x128xi32>
    %34 = arith.cmpi eq, %32, %33 : vector<16x128xi32>
    %35 = arith.extui %29 : i1 to i32
    %c0_i32_16 = arith.constant 0 : i32
    %36 = arith.cmpi ne, %35, %c0_i32_16 : i32
    scf.if %36 {
      %c16_i32_22 = arith.constant 16 : i32
      %44 = arith.muli %arg0, %c16_i32_22 : i32
      %45 = tpu.iota {dimensions = array<i32: 0>} : vector<16x128xi32>
      %46 = vector.broadcast %44 : i32 to vector<16x128xi32>
      %47 = arith.addi %46, %45 : vector<16x128xi32>
      %c128_i32_23 = arith.constant 128 : i32
      %48 = arith.muli %arg1, %c128_i32_23 : i32
      %49 = tpu.iota {dimensions = array<i32: 1>} : vector<16x128xi32>
      %50 = vector.broadcast %48 : i32 to vector<16x128xi32>
      %51 = arith.addi %50, %49 : vector<16x128xi32>
      %52 = arith.cmpi ne, %47, %51 : vector<16x128xi32>
      %cst_24 = arith.constant 0.000000e+00 : f32
      %53 = vector.broadcast %cst_24 : f32 to vector<16x128xf32>
      %54 = arith.select %52, %14, %53 : vector<16x128xi1>, vector<16x128xf32>
      %cst_25 = arith.constant 0.000000e+00 : f32
      %55 = vector.broadcast %cst_25 : f32 to vector<16x128xf32>
      %56 = arith.select %20, %54, %55 : vector<16x128xi1>, vector<16x128xf32>
      %57 = arith.andi %34, %52 : vector<16x128xi1>
      %cst_26 = arith.constant 0.000000e+00 : f32
      %58 = vector.broadcast %cst_26 : f32 to vector<16x128xf32>
      %59 = arith.select %57, %5, %58 : vector<16x128xi1>, vector<16x128xf32>
      %c0_27 = arith.constant 0 : index
      %c0_28 = arith.constant 0 : index
      %60 = vector.load %arg9[%c0_27, %c0_28] : memref<16x1xf32, #tpu.memory_space<vmem>>, vector<16x1xf32>
      %61 = arith.mulf %11, %60 : vector<16x1xf32>
      %cst_29 = arith.constant dense<0.000000e+00> : vector<16xf32>
      %62 = vector.multi_reduction <add>, %56, %cst_29 [1] : vector<16x128xf32> to vector<16xf32>
      %63 = vector.shape_cast %62 : vector<16xf32> to vector<16x1xf32>
      %64 = arith.addf %61, %63 : vector<16x1xf32>
      %c0_30 = arith.constant 0 : index
      %c0_31 = arith.constant 0 : index
      %65 = vector.load %arg9[%c0_30, %c0_31] : memref<16x1xf32, #tpu.memory_space<vmem>>, vector<16x1xf32>
      tpu.vector_store %arg9[%c0_30, %c0_31], %64 {strides = array<i32>} : memref<16x1xf32, #tpu.memory_space<vmem>>, vector<16x1xf32>,
      %c0_32 = arith.constant 0 : index
      %c0_33 = arith.constant 0 : index
      %66 = vector.load %arg10[%c0_32, %c0_33] : memref<16x1xf32, #tpu.memory_space<vmem>>, vector<16x1xf32>
      %cst_34 = arith.constant dense<0.000000e+00> : vector<16xf32>
      %67 = vector.multi_reduction <add>, %59, %cst_34 [1] : vector<16x128xf32> to vector<16xf32>
      %68 = vector.shape_cast %67 : vector<16xf32> to vector<16x1xf32>
      %69 = arith.addf %66, %68 : vector<16x1xf32>
      %c0_35 = arith.constant 0 : index
      %c0_36 = arith.constant 0 : index
      %70 = vector.load %arg10[%c0_35, %c0_36] : memref<16x1xf32, #tpu.memory_space<vmem>>, vector<16x1xf32>
      tpu.vector_store %arg10[%c0_35, %c0_36], %69 {strides = array<i32>} : memref<16x1xf32, #tpu.memory_space<vmem>>, vector<16x1xf32>,
    } else {
    }
    %true = arith.constant true
    %37 = arith.xori %29, %true : i1
    %38 = arith.extui %37 : i1 to i32
    %c0_i32_17 = arith.constant 0 : i32
    %39 = arith.cmpi ne, %38, %c0_i32_17 : i32
    scf.if %39 {
      %cst_22 = arith.constant 0.000000e+00 : f32
      %44 = vector.broadcast %cst_22 : f32 to vector<16x128xf32>
      %45 = arith.select %20, %14, %44 : vector<16x128xi1>, vector<16x128xf32>
      %cst_23 = arith.constant 0.000000e+00 : f32
      %46 = vector.broadcast %cst_23 : f32 to vector<16x128xf32>
      %47 = arith.select %34, %5, %46 : vector<16x128xi1>, vector<16x128xf32>
      %c0_24 = arith.constant 0 : index
      %c0_25 = arith.constant 0 : index
      %48 = vector.load %arg9[%c0_24, %c0_25] : memref<16x1xf32, #tpu.memory_space<vmem>>, vector<16x1xf32>
      %49 = arith.mulf %11, %48 : vector<16x1xf32>
      %cst_26 = arith.constant dense<0.000000e+00> : vector<16xf32>
      %50 = vector.multi_reduction <add>, %45, %cst_26 [1] : vector<16x128xf32> to vector<16xf32>
      %51 = vector.shape_cast %50 : vector<16xf32> to vector<16x1xf32>
      %52 = arith.addf %49, %51 : vector<16x1xf32>
      %c0_27 = arith.constant 0 : index
      %c0_28 = arith.constant 0 : index
      %53 = vector.load %arg9[%c0_27, %c0_28] : memref<16x1xf32, #tpu.memory_space<vmem>>, vector<16x1xf32>
      tpu.vector_store %arg9[%c0_27, %c0_28], %52 {strides = array<i32>} : memref<16x1xf32, #tpu.memory_space<vmem>>, vector<16x1xf32>,
      %c0_29 = arith.constant 0 : index
      %c0_30 = arith.constant 0 : index
      %54 = vector.load %arg10[%c0_29, %c0_30] : memref<16x1xf32, #tpu.memory_space<vmem>>, vector<16x1xf32>
      %cst_31 = arith.constant dense<0.000000e+00> : vector<16xf32>
      %55 = vector.multi_reduction <add>, %47, %cst_31 [1] : vector<16x128xf32> to vector<16xf32>
      %56 = vector.shape_cast %55 : vector<16xf32> to vector<16x1xf32>
      %57 = arith.addf %54, %56 : vector<16x1xf32>
      %c0_32 = arith.constant 0 : index
      %c0_33 = arith.constant 0 : index
      %58 = vector.load %arg10[%c0_32, %c0_33] : memref<16x1xf32, #tpu.memory_space<vmem>>, vector<16x1xf32>
      tpu.vector_store %arg10[%c0_32, %c0_33], %57 {strides = array<i32>} : memref<16x1xf32, #tpu.memory_space<vmem>>, vector<16x1xf32>,
    } else {
    }
    %c0_18 = arith.constant 0 : index
    %c0_19 = arith.constant 0 : index
    %40 = vector.load %arg8[%c0_18, %c0_19] : memref<16x1xf32, #tpu.memory_space<vmem>>, vector<16x1xf32>
    tpu.vector_store %arg8[%c0_18, %c0_19], %9 {strides = array<i32>} : memref<16x1xf32, #tpu.memory_space<vmem>>, vector<16x1xf32>,
    %c0_i32_20 = arith.constant 0 : i32
    %41 = arith.cmpi eq, %arg1, %c0_i32_20 : i32
    %42 = arith.extui %41 : i1 to i32
    %c0_i32_21 = arith.constant 0 : i32
    %43 = arith.cmpi ne, %42, %c0_i32_21 : i32
    scf.if %43 {
      %c0_22 = arith.constant 0 : index
      %c0_23 = arith.constant 0 : index
      %44 = vector.load %arg10[%c0_22, %c0_23] : memref<16x1xf32, #tpu.memory_space<vmem>>, vector<16x1xf32>
      %c0_24 = arith.constant 0 : index
      %c0_25 = arith.constant 0 : index
      %45 = vector.load %arg2[%c0_24, %c0_25] : memref<16x1xf32, #tpu.memory_space<vmem>>, vector<16x1xf32>
      %46 = arith.divf %44, %45 : vector<16x1xf32>
      %c0_26 = arith.constant 0 : index
      %c0_27 = arith.constant 0 : index
      %47 = vector.load %arg8[%c0_26, %c0_27] : memref<16x1xf32, #tpu.memory_space<vmem>>, vector<16x1xf32>
      %48 = arith.subf %46, %47 : vector<16x1xf32>
      %c0_28 = arith.constant 0 : index
      %c0_29 = arith.constant 0 : index
      %49 = vector.load %arg9[%c0_28, %c0_29] : memref<16x1xf32, #tpu.memory_space<vmem>>, vector<16x1xf32>
      %50 = math.log %49 : vector<16x1xf32>
      %51 = arith.subf %48, %50 : vector<16x1xf32>
      %cst_30 = arith.constant -1.000000e+00 : f32
      %52 = vector.broadcast %cst_30 : f32 to vector<16x1xf32>
      %53 = arith.mulf %52, %51 : vector<16x1xf32>
      %c0_31 = arith.constant 0 : index
      %c0_32 = arith.constant 0 : index
      %54 = vector.load %arg7[%c0_31, %c0_32] : memref<16x1xf32, #tpu.memory_space<vmem>>, vector<16x1xf32>
      tpu.vector_store %arg7[%c0_31, %c0_32], %53 {strides = array<i32>} : memref<16x1xf32, #tpu.memory_space<vmem>>, vector<16x1xf32>,
    } else {
    }
    return
  }
  func.func @transform_0(%arg0: i32, %arg1: i32) -> (i32, i32) {
    %c0_i32 = arith.constant 0 : i32
    %c0_i32_0 = arith.constant 0 : i32
    return %arg0, %c0_i32 : i32, i32
  }
  func.func @transform_1(%arg0: i32, %arg1: i32) -> (i32, i32) {
    %c0_i32 = arith.constant 0 : i32
    %c0_i32_0 = arith.constant 0 : i32
    return %arg0, %c0_i32 : i32, i32
  }
  func.func @transform_2(%arg0: i32, %arg1: i32) -> (i32, i32) {
    %c0_i32 = arith.constant 0 : i32
    %c0_i32_0 = arith.constant 0 : i32
    return %c0_i32, %arg1 : i32, i32
  }
  func.func @transform_3(%arg0: i32, %arg1: i32) -> (i32, i32) {
    %c0_i32 = arith.constant 0 : i32
    %c0_i32_0 = arith.constant 0 : i32
    return %arg0, %c0_i32 : i32, i32
  }
  func.func @transform_4(%arg0: i32, %arg1: i32) -> (i32, i32) {
    %c0_i32 = arith.constant 0 : i32
    %c0_i32_0 = arith.constant 0 : i32
    return %c0_i32, %arg1 : i32, i32
  }
  func.func @transform_5(%arg0: i32, %arg1: i32) -> (i32, i32) {
    %c0_i32 = arith.constant 0 : i32
    %c0_i32_0 = arith.constant 0 : i32
    return %arg0, %c0_i32 : i32, i32
  }
}

</mosaic_0001>

<llo_original>
// kernel: tpu_custom_call.1
$region0: #{tpu_custom_call.1}
  #allocation0 [shape = 'u32[]', space=smem, size = 0x4, offset = 0x4, fixed_abs, tag = 'smem constant byte address 0x4 - core index']
  #allocation1 [shape = 'u32[144,128]{1,0:T(1,128)}', space=vmem, size = 0x12000, scoped, tag = 'internal scratch']
  #allocation2 [shape = 'f32[16,1]{1,0:T(8,128)}', space=vmem, size = 0x2000, scoped, tag = 'scratch operand']
  #allocation3 [shape = 'f32[16,1]{1,0:T(8,128)}', space=vmem, size = 0x2000, scoped, tag = 'scratch operand']
  #allocation4 [shape = 'f32[16,1]{1,0:T(8,128)}', space=vmem, size = 0x2000, scoped, tag = 'scratch operand']
  #allocation5 [shape = 'f32[16,128]{1,0:T(8,128)}', space=vmem, size = 0x2000, scoped, tag = 'scratch operand']
  %s0 = inlined_call_operand.vmem [shape: f32[16,1], index: 0, kind: input, shape index: {}]
  %s1 = inlined_call_operand.vmem [shape: s32[16,1], index: 1, kind: input, shape index: {}]
  %s2 = inlined_call_operand.vmem [shape: s32[1,128], index: 2, kind: input, shape index: {}]
  %s3 = inlined_call_operand.vmem [shape: f32[16,128], index: 3, kind: input, shape index: {}]
  %s4 = inlined_call_operand.hbm [shape: f32[128,128], index: 4, kind: input, shape index: {}]
  %s5 = inlined_call_operand.vmem [shape: f32[16,1], index: 5, kind: output, shape index: {}]
  %s6 = sld [smem:[#allocation0]]
  $region50: #{tpu_custom_call.1} parent=0
    _
  %s8 = ssub.s32 1, %s6
  %s9 = scalar_select 0, %s8, %s6
  $region1: #{tpu_custom_call.1} parent=0
    #allocation6 [shape = 'u8[65536]{0}', space=vmem, size = 0x10000, scoped, tag = 'input window, operand 4, single buffered']
    #allocation7 [shape = 's32[1]{0}', space=sflag, size = 0x4, scoped, tag = 'scoped memory for tpu_custom_call.1']
    %10 = vsyncpa [#allocation7], 0
    // Predicated region
    $region2: #{tpu_custom_call.1} parent=1 // pred_check
      _
    $region3: #{tpu_custom_call.1} parent=1 // pred_check_branch
      %12 = sbr.rel (0) target = $region5
    $region4: #{tpu_custom_call.1} parent=1 // pred_region
      _
    $region5: #{tpu_custom_call.1} parent=1 // pred_fallthru
      _
    // Predicated region
    $region6: #{tpu_custom_call.1} parent=1 // pred_check
      _
    $region7: #{tpu_custom_call.1} parent=1 // pred_check_branch
      %14 = sbr.rel (0) target = $region9
    $region8: #{tpu_custom_call.1} parent=1 // pred_region
      _
    $region9: #{tpu_custom_call.1} parent=1 // pred_fallthru
      _
    // Predicated region
    $region10: #{tpu_custom_call.1} parent=1 // pred_check
      _
    $region11: #{tpu_custom_call.1} parent=1 // pred_check_branch
      %16 = sbr.rel (0) target = $region13
    $region12: #{tpu_custom_call.1} parent=1 // pred_region
      _
    $region13: #{tpu_custom_call.1} parent=1 // pred_fallthru
      _
    // Predicated region
    $region14: #{tpu_custom_call.1} parent=1 // pred_check
      _
    $region15: #{tpu_custom_call.1} parent=1 // pred_check_branch
      %18 = sbr.rel (0) target = $region17
    $region16: #{tpu_custom_call.1} parent=1 // pred_region
      _
    $region17: #{tpu_custom_call.1} parent=1 // pred_fallthru
      _
    // Predicated region
    $region18: #{tpu_custom_call.1} parent=1 // pred_check
      _
    $region19: #{tpu_custom_call.1} parent=1 // pred_check_branch
      %20 = sbr.rel (0) target = $region21
    $region20: #{tpu_custom_call.1} parent=1 // pred_region
      %s22 = ssub.s32 2048, 2048
      %23 = vsyncadd [#allocation7], %s22
      %s24 = sshll.u32 [#allocation6], 4
      %s25 = int_to_ptr.vmem [resolvable:$true] %s24
      %30 = dma.hbm_to_vmem [thread:$0]  %s4, 2048, %s25, [#allocation7], 128, 128, 8
    $region21: #{tpu_custom_call.1} parent=1 // pred_fallthru
      _
    // Predicated region
    $region22: #{tpu_custom_call.1} parent=1 // pred_check
      _
    $region23: #{tpu_custom_call.1} parent=1 // pred_check_branch
      %32 = sbr.rel (0) target = $region25
    $region24: #{tpu_custom_call.1} parent=1 // pred_region
      %33 = dma.done [#allocation7], 2048
    $region25: #{tpu_custom_call.1} parent=1 // pred_fallthru
      _
    %p34 = scmp.eq.s32.totalorder 0, 0
    // Predicated region
    $region26: #{tpu_custom_call.1} parent=1 // pred_check
      %p35 = pneg %p34
    $region27: #{tpu_custom_call.1} parent=1 // pred_check_branch
      %37 = sbr.rel (%p35) target = $region29
    $region28: #{tpu_custom_call.1} parent=1 // pred_region
      %vm38 = vcmask 7168
      %39 = vst.msk [vmem:[#allocation2] sm:$0xff] %vm38, -inf
      %40 = vst.msk [vmem:[#allocation2 + $0x8] sm:$0xff] %vm38, -inf
      %41 = vst.msk [vmem:[#allocation3] sm:$0xff] %vm38, 0.0
      %42 = vst.msk [vmem:[#allocation3 + $0x8] sm:$0xff] %vm38, 0.0
      %43 = vst.msk [vmem:[#allocation4] sm:$0xff] %vm38, 0.0
      %44 = vst.msk [vmem:[#allocation4 + $0x8] sm:$0xff] %vm38, 0.0
      %v45 = vld [vmem:[%s3] sm:$0xff]
      %v46 = vld [vmem:[%s3 + $0x8] sm:$0xff]
      %v47 = vmul.f32 %v45, 14.285714
      %v48 = vmul.f32 %v46, 14.285714
      %49 = vst [vmem:[#allocation5] sm:$0xff] %v47
      %50 = vst [vmem:[#allocation5 + $0x8] sm:$0xff] %v48
    $region29: #{tpu_custom_call.1} parent=1 // pred_fallthru
      _
    %v51 = vld [vmem:[#allocation6] sm:$0xff]
    %v52 = vld [vmem:[#allocation6 + $0x8] sm:$0xff]
    %v53 = vld [vmem:[#allocation6 + $0x10] sm:$0xff]
    %v54 = vld [vmem:[#allocation6 + $0x18] sm:$0xff]
    %v55 = vld [vmem:[#allocation6 + $0x20] sm:$0xff]
    %v56 = vld [vmem:[#allocation6 + $0x28] sm:$0xff]
    %v57 = vld [vmem:[#allocation6 + $0x30] sm:$0xff]
    %v58 = vld [vmem:[#allocation6 + $0x38] sm:$0xff]
    %v59 = vld [vmem:[#allocation6 + $0x40] sm:$0xff]
    %v60 = vld [vmem:[#allocation6 + $0x48] sm:$0xff]
    %v61 = vld [vmem:[#allocation6 + $0x50] sm:$0xff]
    %v62 = vld [vmem:[#allocation6 + $0x58] sm:$0xff]
    %v63 = vld [vmem:[#allocation6 + $0x60] sm:$0xff]
    %v64 = vld [vmem:[#allocation6 + $0x68] sm:$0xff]
    %v65 = vld [vmem:[#allocation6 + $0x70] sm:$0xff]
    %v66 = vld [vmem:[#allocation6 + $0x78] sm:$0xff]
    %v67 = vld [vmem:[#allocation5] sm:$0xff]
    %v68 = vld [vmem:[#allocation5 + $0x8] sm:$0xff]
    %69 = vmatprep.subr.mxu0 0.0
    %70 = vmatpush1.msra.mxu0 %v66
    %71 = vmatprep.subr.mxu0 0.0
    %72 = vmatpush1.msra.mxu0 %v65
    %73 = vmatprep.subr.mxu0 0.0
    %74 = vmatpush1.msra.mxu0 %v64
    %75 = vmatprep.subr.mxu0 0.0
    %76 = vmatpush1.msra.mxu0 %v63
    %77 = vmatprep.subr.mxu0 0.0
    %78 = vmatpush1.msra.mxu0 %v62
    %79 = vmatprep.subr.mxu0 0.0
    %80 = vmatpush1.msra.mxu0 %v61
    %81 = vmatprep.subr.mxu0 0.0
    %82 = vmatpush1.msra.mxu0 %v60
    %83 = vmatprep.subr.mxu0 0.0
    %84 = vmatpush1.msra.mxu0 %v59
    %85 = vmatprep.subr.mxu0 0.0
    %86 = vmatpush1.msra.mxu0 %v58
    %87 = vmatprep.subr.mxu0 0.0
    %88 = vmatpush1.msra.mxu0 %v57
    %89 = vmatprep.subr.mxu0 0.0
    %90 = vmatpush1.msra.mxu0 %v56
    %91 = vmatprep.subr.mxu0 0.0
    %92 = vmatpush1.msra.mxu0 %v55
    %93 = vmatprep.subr.mxu0 0.0
    %94 = vmatpush1.msra.mxu0 %v54
    %95 = vmatprep.subr.mxu0 0.0
    %96 = vmatpush1.msra.mxu0 %v53
    %97 = vmatprep.subr.mxu0 0.0
    %98 = vmatpush1.msra.mxu0 %v52
    %99 = vmatprep.subr.mxu0 0.0
    %100 = vmatpush1.msra.mxu0 %v51
    %101 = vmatprep.subr.mxu0 0.0
    %102 = vmatpush2.msra.mxu0 0.0
    %103 = vmatprep.subr.mxu0 0.0
    %104 = vmatpush2.msra.mxu0 0.0
    %105 = vmatprep.subr.mxu0 0.0
    %106 = vmatpush2.msra.mxu0 0.0
    %107 = vmatprep.subr.mxu0 0.0
    %108 = vmatpush2.msra.mxu0 0.0
    %109 = vmatprep.subr.mxu0 0.0
    %110 = vmatpush2.msra.mxu0 0.0
    %111 = vmatprep.subr.mxu0 0.0
    %112 = vmatpush2.msra.mxu0 0.0
    %113 = vmatprep.subr.mxu0 0.0
    %114 = vmatpush2.msra.mxu0 0.0
    %115 = vmatprep.subr.mxu0 0.0
    %116 = vmatpush2.msra.mxu0 0.0
    %117 = vmatprep.subr.mxu0 0.0
    %118 = vmatpush2.msra.mxu0 0.0
    %119 = vmatprep.subr.mxu0 0.0
    %120 = vmatpush2.msra.mxu0 0.0
    %121 = vmatprep.subr.mxu0 0.0
    %122 = vmatpush2.msra.mxu0 0.0
    %123 = vmatprep.subr.mxu0 0.0
    %124 = vmatpush2.msra.mxu0 0.0
    %125 = vmatprep.subr.mxu0 0.0
    %126 = vmatpush2.msra.mxu0 0.0
    %127 = vmatprep.subr.mxu0 0.0
    %128 = vmatpush2.msra.mxu0 0.0
    %129 = vmatprep.subr.mxu0 0.0
    %130 = vmatpush2.msra.mxu0 0.0
    %131 = vmatprep.subr.mxu0 0.0
    %132 = vmatpush2.msra.mxu0 0.0
    %133 = vmatprep.mubr.f32.mxu0 0.0
    %134 = vmatmul.mubr.f32.gmra.mxu0 %v67
    %v135 = vpop.f32.mrf.mxu0
    %v136 = vadd.f32 0.0, %v135
    %v137 = vpop.f32.mrf.mxu0
    %138 = vmatprep.mubr.f32.mxu0 0.0
    %139 = vmatmul.mubr.f32.gmra.mxu0 %v68
    %v140 = vpop.f32.mrf.mxu0
    %v141 = vadd.f32 0.0, %v140
    %v142 = vpop.f32.mrf.mxu0
    %143 = vdwg.mxu0
    %v144 = vld [vmem:[#allocation2] sm:$0xff]
    %v145 = vld [vmem:[#allocation2 + $0x8] sm:$0xff]
    %146 = vmax.xlane.f32.xlu0 %v136
    %v147 = vpop.xlane.xlu0 %146
    %148 = vmax.xlane.f32.xlu0 %v141
    %v149 = vpop.xlane.xlu0 %148
    %v150 = vmax.f32 %v144, %v147
    %v151 = vmax.f32 %v145, %v149
    %v152 = vsub.f32 %v144, %v150
    %v153 = vsub.f32 %v145, %v151
    %v154 = vmul.f32 %v152, 1.442695
    %v155 = vpow.pop %v154
    %v156 = vmul.f32 %v153, 1.442695
    %v157 = vpow.pop %v156
    %159 = vset.pattern.permute.xlu0 0
    %160 = vperm.xlu0 %159, %v150
    %v161 = vpop.permute.xlu0 %160
    %164 = vset.pattern.permute.xlu0 0
    %165 = vperm.xlu0 %164, %v151
    %v166 = vpop.permute.xlu0 %165
    %v168 = vsub.f32 %v136, %v161
    %v169 = vsub.f32 %v141, %v166
    %v170 = vmul.f32 %v168, 1.442695
    %v171 = vpow.pop %v170
    %v172 = vmul.f32 %v169, 1.442695
    %v173 = vpow.pop %v172
    %s174 = smul.u32 0, 128
    %v175 = vlaneseq
    %v176 = vand.u32 %v175, 127
    %v177 = vstv %s174
    %v178 = vadd.s32 %v177, %v176
    %vm179 = vcmp.lt.s32.totalorder %v178, 16
    %s180 = smul.u32 0, 16
    %s181 = sadd.s32 0, 1
    %s182 = smul.u32 %s181, 128
    %p183 = scmp.lt.s32.totalorder %s180, %s182
    %s184 = sadd.s32 0, 1
    %s185 = smul.u32 %s184, 16
    %p186 = scmp.lt.s32.totalorder %s174, %s185
    %p187 = pnand %p183, %p186
    %p188 = pneg %p187
    %v189 = vld [vmem:[%s1] sm:$0xff]
    %v190 = vld [vmem:[%s1 + $0x8] sm:$0xff]
    %v191 = vld [vmem:[%s2] sm:$0x1]
    %192 = vset.pattern.permute.xlu0 0
    %193 = vperm.xlu0 %192, %v189
    %v194 = vpop.permute.xlu0 %193
    %195 = vset.pattern.permute.xlu0 0
    %196 = vperm.xlu0 %195, %v190
    %v197 = vpop.permute.xlu0 %196
    %v198 = vlaneseq
    %v199 = vshrl.u32 %v198, 7
    %v200 = vsub.s32 0, %v199
    %v201 = vrot.slane %v191, %v200
    %vm202 = vcmp.eq.s32.totalorder %v194, %v201
    %vm203 = vcmp.eq.s32.totalorder %v197, %v201
    // Predicated region
    $region30: #{tpu_custom_call.1} parent=1 // pred_check
      _
    $region31: #{tpu_custom_call.1} parent=1 // pred_check_branch
      %205 = sbr.rel (%p187) target = $region33
    $region32: #{tpu_custom_call.1} parent=1 // pred_region
      %v206 = vlaneseq
      %v207 = vshrl.u32 %v206, 7
      %v208 = vadd.s32 %v207, 8
      %v209 = vstv %s180
      %v210 = vadd.s32 %v209, %v207
      %v211 = vadd.s32 %v209, %v208
      %vm212 = vcmp.ne.s32.totalorder %v210, %v178
      %vm213 = vcmp.ne.s32.totalorder %v211, %v178
      %v214 = vsel %vm212, %v171, 0.0
      %v215 = vsel %vm213, %v173, 0.0
      %v216 = vsel %vm179, %v214, 0.0
      %v217 = vsel %vm179, %v215, 0.0
      %vm218 = vmand %vm202, %vm212
      %vm219 = vmand %vm203, %vm213
      %v220 = vsel %vm218, %v136, 0.0
      %v221 = vsel %vm219, %v141, 0.0
      %v222 = vld [vmem:[#allocation3] sm:$0xff]
      %v223 = vld [vmem:[#allocation3 + $0x8] sm:$0xff]
      %v224 = vmul.f32 %v155, %v222
      %v225 = vmul.f32 %v157, %v223
      %226 = vadd.xlane.f32.xlu0 %v216
      %v227 = vpop.xlane.xlu0 %226
      %228 = vadd.xlane.f32.xlu0 %v217
      %v229 = vpop.xlane.xlu0 %228
      %v230 = vadd.f32 %v224, %v227
      %v231 = vadd.f32 %v225, %v229
      %vm232 = vcmask 7168
      %233 = vst.msk [vmem:[#allocation3] sm:$0xff] %vm232, %v230
      %234 = vst.msk [vmem:[#allocation3 + $0x8] sm:$0xff] %vm232, %v231
      %v235 = vld [vmem:[#allocation4] sm:$0xff]
      %v236 = vld [vmem:[#allocation4 + $0x8] sm:$0xff]
      %237 = vadd.xlane.f32.xlu0 %v220
      %v238 = vpop.xlane.xlu0 %237
      %239 = vadd.xlane.f32.xlu0 %v221
      %v240 = vpop.xlane.xlu0 %239
      %v241 = vadd.f32 %v235, %v238
      %v242 = vadd.f32 %v236, %v240
      %243 = vst.msk [vmem:[#allocation4] sm:$0xff] %vm232, %v241
      %244 = vst.msk [vmem:[#allocation4 + $0x8] sm:$0xff] %vm232, %v242
    $region33: #{tpu_custom_call.1} parent=1 // pred_fallthru
      _
    %p245 = pneg %p188
    // Predicated region
    $region34: #{tpu_custom_call.1} parent=1 // pred_check
      _
    $region35: #{tpu_custom_call.1} parent=1 // pred_check_branch
      %247 = sbr.rel (%p188) target = $region37
    $region36: #{tpu_custom_call.1} parent=1 // pred_region
      %v248 = vsel %vm179, %v171, 0.0
      %v249 = vsel %vm179, %v173, 0.0
      %v250 = vsel %vm202, %v136, 0.0
      %v251 = vsel %vm203, %v141, 0.0
      %v252 = vld [vmem:[#allocation3] sm:$0xff]
      %v253 = vld [vmem:[#allocation3 + $0x8] sm:$0xff]
      %v254 = vmul.f32 %v155, %v252
      %v255 = vmul.f32 %v157, %v253
      %256 = vadd.xlane.f32.xlu0 %v248
      %v257 = vpop.xlane.xlu0 %256
      %258 = vadd.xlane.f32.xlu0 %v249
      %v259 = vpop.xlane.xlu0 %258
      %v260 = vadd.f32 %v254, %v257
      %v261 = vadd.f32 %v255, %v259
      %vm262 = vcmask 7168
      %263 = vst.msk [vmem:[#allocation3] sm:$0xff] %vm262, %v260
      %264 = vst.msk [vmem:[#allocation3 + $0x8] sm:$0xff] %vm262, %v261
      %v265 = vld [vmem:[#allocation4] sm:$0xff]
      %v266 = vld [vmem:[#allocation4 + $0x8] sm:$0xff]
      %267 = vadd.xlane.f32.xlu0 %v250
      %v268 = vpop.xlane.xlu0 %267
      %269 = vadd.xlane.f32.xlu0 %v251
      %v270 = vpop.xlane.xlu0 %269
      %v271 = vadd.f32 %v265, %v268
      %v272 = vadd.f32 %v266, %v270
      %273 = vst.msk [vmem:[#allocation4] sm:$0xff] %vm262, %v271
      %274 = vst.msk [vmem:[#allocation4 + $0x8] sm:$0xff] %vm262, %v272
    $region37: #{tpu_custom_call.1} parent=1 // pred_fallthru
      _
    %vm275 = vcmask 7168
    %276 = vst.msk [vmem:[#allocation2] sm:$0xff] %vm275, %v150
    %277 = vst.msk [vmem:[#allocation2 + $0x8] sm:$0xff] %vm275, %v151
    // Predicated region
    $region38: #{tpu_custom_call.1} parent=1 // pred_check
      %p278 = pneg %p34
    $region39: #{tpu_custom_call.1} parent=1 // pred_check_branch
      %280 = sbr.rel (%p278) target = $region41
    $region40: #{tpu_custom_call.1} parent=1 // pred_region
      %v281 = vld [vmem:[#allocation4] sm:$0xff]
      %v282 = vld [vmem:[#allocation4 + $0x8] sm:$0xff]
      %v283 = vld [vmem:[%s0] sm:$0xff]
      %v284 = vld [vmem:[%s0 + $0x8] sm:$0xff]
      %v285 = vrcp.pop %v283
      %v286 = vmul.f32 %v281, %v285
      %v287 = vrcp.pop %v284
      %v288 = vmul.f32 %v282, %v287
      %v289 = vld [vmem:[#allocation2] sm:$0xff]
      %v290 = vld [vmem:[#allocation2 + $0x8] sm:$0xff]
      %v291 = vsub.f32 %v286, %v289
      %v292 = vsub.f32 %v288, %v290
      %v293 = vld [vmem:[#allocation3] sm:$0xff]
      %v294 = vld [vmem:[#allocation3 + $0x8] sm:$0xff]
      %v295 = vlog2.pop %v293
      %v296 = vmul.f32 %v295, 0.6931472
      %v297 = vlog2.pop %v294
      %v298 = vmul.f32 %v297, 0.6931472
      %v299 = vsub.f32 %v291, %v296
      %v300 = vsub.f32 %v292, %v298
      %v301 = vmul.f32 %v299, -1.0
      %v302 = vmul.f32 %v300, -1.0
      %303 = vst.msk [vmem:[%s5] sm:$0xff] %vm275, %v301
      %304 = vst.msk [vmem:[%s5 + $0x8] sm:$0xff] %vm275, %v302
    $region41: #{tpu_custom_call.1} parent=1 // pred_fallthru
      _
    // Predicated region
    $region42: #{tpu_custom_call.1} parent=1 // pred_check
      _
    $region43: #{tpu_custom_call.1} parent=1 // pred_check_branch
      %306 = sbr.rel (0) target = $region45
    $region44: #{tpu_custom_call.1} parent=1 // pred_region
      _
    $region45: #{tpu_custom_call.1} parent=1 // pred_fallthru
      _
    // Predicated region
    $region46: #{tpu_custom_call.1} parent=1 // pred_check
      _
    $region47: #{tpu_custom_call.1} parent=1 // pred_check_branch
      %308 = sbr.rel (0) target = $region49
    $region48: #{tpu_custom_call.1} parent=1 // pred_region
      _
    $region49: #{tpu_custom_call.1} parent=1 // pred_fallthru
      _
    %309 = vsyncpa [#allocation7], 1

</llo_original>
